<compile_context>
chip_gen: v7x
topology: tpu7x:2x2x1
jax: 0.10.0
libtpu: 0.0.40
codegen_flags: <defaults>
</compile_context>

<pallas_src>
import jax
import jax.numpy as jnp
from jax import lax
from jax.experimental import pallas as pl
from jax.experimental.pallas import tpu as pltpu

LN_EPS = 1e-5

_MiB = 1024 * 1024


def _cdiv(a: int, b: int) -> int:
    return -(-a // b)


def _layernorm_kernel(x_ref, w_ref, b_ref, o_ref):
    # x_ref: (row_tile, H) tile in VMEM; w_ref/b_ref: (1, H).
    x = x_ref[...].astype(jnp.float32)
    h = x.shape[-1]
    inv_h = jnp.float32(1.0 / h)

    # Two-pass statistics on the VMEM-resident tile (numerically matches the
    # nn.LayerNorm reference; extra pass is hidden under HBM DMA).
    mean = jnp.sum(x, axis=-1, keepdims=True) * inv_h
    xc = x - mean
    var = jnp.sum(xc * xc, axis=-1, keepdims=True) * inv_h
    inv = lax.rsqrt(var + LN_EPS)  # EUP op — effectively free slot-wise

    wf = w_ref[...].astype(jnp.float32)
    bf = b_ref[...].astype(jnp.float32)
    # Folded affine: y = (x - mean) * (inv * w) + b
    o_ref[...] = (xc * (inv * wf) + bf).astype(o_ref.dtype)


def _vmem_capacity_bytes() -> int:
    """Physical VMEM per TensorCore; conservative fallback if query fails."""
    try:
        return int(pltpu.get_tpu_info().vmem_capacity_bytes)
    except Exception:
        return 64 * _MiB  # assume the smallest (v7x-like) part if unknown


def _default_vmem_budget(vmem_cap: int) -> int:
    """Budget for the kernel's working set, generation-aware."""
    if vmem_cap <= 64 * _MiB:
        # v7x-class: 64 MiB/TC — keep working set ~<= 44 MiB.
        return 44 * _MiB
    # v5e/v6e-class: 128 MiB — plenty of headroom.
    return 56 * _MiB


def _choose_row_tile(rows: int, H: int, dtype, vmem_budget_bytes: int,
                     target_tile_bytes: int) -> int:
    """Pick a sublane-aligned row tile: grow toward a multi-MiB input tile while
    keeping double-buffered in+out tiles plus ~4 tile-sized fp32 temps inside
    the VMEM budget."""
    dtype_bytes = jnp.dtype(dtype).itemsize
    # Sublane packing: 8 rows for 4-byte, 16 for 2-byte, 32 for 1-byte dtypes.
    sublane = max(8, 32 // max(dtype_bytes, 1))
    # Per-row VMEM cost:
    #   input:  2 buffers * H * dtype_bytes   (double-buffered)
    #   output: 2 buffers * H * dtype_bytes
    #   ~4 tile-sized fp32 temps in the body (x cast, xc, xc*xc/scale, result)
    per_row = 2 * H * dtype_bytes + 2 * H * dtype_bytes + 4 * H * 4
    budget_rows = max(sublane, vmem_budget_bytes // max(per_row, 1))
    # Target a large input tile (amortizes per-step pipeline overhead).
    target_rows = max(sublane, target_tile_bytes // max(H * dtype_bytes, 1))
    row_tile = min(budget_rows, target_rows)
    # Align down to the sublane multiple.
    row_tile = max(sublane, (row_tile // sublane) * sublane)
    # Never bigger than the (sublane-rounded) row count.
    rows_rounded = _cdiv(rows, sublane) * sublane
    return min(row_tile, rows_rounded)


def gpt_prenorm(hidden_states, input_ids, ln_weight, ln_bias, *,
                row_tile=None, vmem_budget_bytes=None,
                target_tile_bytes=8 * _MiB):
    """Equivalent of GPTPreNorm_.forward.

    hidden_states: [B, S, H] float
    input_ids:     [B, S]    int
    ln_weight/ln_bias: [H]
    returns (ln_f(hidden_states), input_ids)   # .clone() is a no-op in JAX
    """
    B, S, H = hidden_states.shape
    rows = B * S
    dtype = hidden_states.dtype
    dtype_bytes = jnp.dtype(dtype).itemsize

    vmem_cap = _vmem_capacity_bytes()
    if vmem_budget_bytes is None:
        vmem_budget_bytes = _default_vmem_budget(vmem_cap)

    if row_tile is None:
        row_tile = _choose_row_tile(rows, H, dtype, vmem_budget_bytes,
                                    target_tile_bytes)

    # Ragged grid: no padding, no post-slice. The last block may read OOB rows
    # (garbage), but LayerNorm is per-row and OOB writes are dropped, so the
    # visible output is exact and no extra HBM traffic is spent.
    grid = (_cdiv(rows, row_tile),)

    x2d = hidden_states.reshape(rows, H)
    w2d = ln_weight.reshape(1, H)
    b2d = ln_bias.reshape(1, H)

    # Scoped-VMEM limit: double-buffered in+out tiles + ~4 fp32 tile temps +
    # params, with slack; floor 32 MiB (v5e scoped default is 16 MiB) and
    # capped under the physical VMEM of this generation.
    tile_bytes = row_tile * H * dtype_bytes
    needed = 2 * tile_bytes + 2 * tile_bytes + 4 * row_tile * H * 4 + 4 * H * 4
    vmem_limit = max(32 * _MiB, int(needed * 1.25))
    vmem_limit = min(vmem_limit, vmem_cap - 4 * _MiB)

    out2d = pl.pallas_call(
        _layernorm_kernel,
        out_shape=jax.ShapeDtypeStruct((rows, H), dtype),
        grid_spec=pltpu.PrefetchScalarGridSpec(
            num_scalar_prefetch=0,
            grid=grid,
            in_specs=[
                pl.BlockSpec((row_tile, H), lambda i: (i, 0)),
                pl.BlockSpec((1, H), lambda i: (0, 0)),
                pl.BlockSpec((1, H), lambda i: (0, 0)),
            ],
            out_specs=pl.BlockSpec((row_tile, H), lambda i: (i, 0)),
        ),
        compiler_params=pltpu.CompilerParams(
            dimension_semantics=("parallel",),
            vmem_limit_bytes=vmem_limit,
        ),
    )(x2d, w2d, b2d)

    hidden_out = out2d.reshape(B, S, H)
    ids_out = jnp.asarray(input_ids)
    return hidden_out, ids_out


def _reference_layernorm(x, w, b):
    x32 = x.astype(jnp.float32)
    mean = jnp.mean(x32, axis=-1, keepdims=True)
    var = jnp.mean((x32 - mean) ** 2, axis=-1, keepdims=True)
    return ((x32 - mean) * lax.rsqrt(var + LN_EPS) * w + b).astype(x.dtype)


if __name__ == "__main__":
    key = jax.random.PRNGKey(0)
    k1, k2, k3, k4, k5, k6 = jax.random.split(key, 6)

    # Small shapes consistent with the module.
    B, S, H = 2, 8, 32
    hidden_states = jax.random.normal(k1, (B, S, H), dtype=jnp.float32)
    input_ids = jax.random.randint(k2, (B, S), 0, 50257, dtype=jnp.int32)

    # Deterministic synthetic LayerNorm params (shape [H] as in nn.LayerNorm(H)).
    ln_weight = 1.0 + 0.1 * jax.random.normal(k3, (H,), dtype=jnp.float32)
    ln_bias = 0.1 * jax.random.normal(k4, (H,), dtype=jnp.float32)

    out_hidden, out_ids = gpt_prenorm(hidden_states, input_ids, ln_weight, ln_bias)
    out_hidden = jax.block_until_ready(out_hidden)
    out_ids = jax.block_until_ready(out_ids)

    ref = _reference_layernorm(hidden_states, ln_weight, ln_bias)
    assert out_hidden.shape == (B, S, H)
    assert out_ids.shape == (B, S)
    assert jnp.allclose(out_hidden, ref, atol=1e-5, rtol=1e-5)
    assert jnp.array_equal(out_ids, input_ids)

    # Ragged-rows test: rows (15) not a multiple of row_tile (8) exercises the
    # partial last block (OOB rows read garbage, writes dropped) and the
    # multi-step grid.
    B2, S2 = 3, 5
    hs2 = jax.random.normal(k5, (B2, S2, H), dtype=jnp.float32)
    ids2 = jax.random.randint(k6, (B2, S2), 0, 50257, dtype=jnp.int32)
    out2, ids2_out = gpt_prenorm(hs2, ids2, ln_weight, ln_bias, row_tile=8)
    out2 = jax.block_until_ready(out2)
    ref2 = _reference_layernorm(hs2, ln_weight, ln_bias)
    assert out2.shape == (B2, S2, H)
    assert jnp.allclose(out2, ref2, atol=1e-5, rtol=1e-5)
    assert jnp.array_equal(ids2_out, ids2)
    assert bool(jnp.isfinite(out2).all())

    print("KERNEL_OK")
</pallas_src>

<mosaic_0001>
module attributes {stable_mosaic.version = 11 : i64} {
  func.func @_layernorm_kernel(%arg0: i32, %arg1: memref<16x32xf32, #tpu.memory_space<vmem>>, %arg2: memref<1x32xf32, #tpu.memory_space<vmem>>, %arg3: memref<1x32xf32, #tpu.memory_space<vmem>>, %arg4: memref<16x32xf32, #tpu.memory_space<vmem>>) attributes {dimension_semantics = [#tpu.dimension_semantics<parallel>], iteration_bounds = array<i64: 1>, scalar_prefetch = 0 : i64, scratch_operands = 0 : i64, tpu.core_type = #tpu.core_type<tc>, window_params = [{transform_indices = @transform_0, window_bounds = array<i64: 16, 32>}, {pipeline_mode = #tpu.pipeline_mode<synchronous>, transform_indices = @transform_1, window_bounds = array<i64: 1, 32>}, {pipeline_mode = #tpu.pipeline_mode<synchronous>, transform_indices = @transform_2, window_bounds = array<i64: 1, 32>}, {transform_indices = @transform_3, window_bounds = array<i64: 16, 32>}]} {
    %c0 = arith.constant 0 : index
    %c0_0 = arith.constant 0 : index
    %0 = vector.load %arg1[%c0, %c0_0] : memref<16x32xf32, #tpu.memory_space<vmem>>, vector<16x32xf32>
    %cst = arith.constant dense<0.000000e+00> : vector<16xf32>
    %1 = vector.multi_reduction <add>, %0, %cst [1] : vector<16x32xf32> to vector<16xf32>
    %2 = vector.shape_cast %1 : vector<16xf32> to vector<16x1xf32>
    %cst_1 = arith.constant 3.125000e-02 : f32
    %3 = vector.broadcast %cst_1 : f32 to vector<16x1xf32>
    %4 = arith.mulf %2, %3 : vector<16x1xf32>
    %5 = vector.broadcast %4 : vector<16x1xf32> to vector<16x32xf32>
    %6 = arith.subf %0, %5 : vector<16x32xf32>
    %7 = arith.mulf %6, %6 : vector<16x32xf32>
    %cst_2 = arith.constant dense<0.000000e+00> : vector<16xf32>
    %8 = vector.multi_reduction <add>, %7, %cst_2 [1] : vector<16x32xf32> to vector<16xf32>
    %9 = vector.shape_cast %8 : vector<16xf32> to vector<16x1xf32>
    %cst_3 = arith.constant 3.125000e-02 : f32
    %10 = vector.broadcast %cst_3 : f32 to vector<16x1xf32>
    %11 = arith.mulf %9, %10 : vector<16x1xf32>
    %cst_4 = arith.constant 9.99999974E-6 : f32
    %12 = vector.broadcast %cst_4 : f32 to vector<16x1xf32>
    %13 = arith.addf %11, %12 : vector<16x1xf32>
    %14 = math.rsqrt %13 : vector<16x1xf32>
    %c0_5 = arith.constant 0 : index
    %c0_6 = arith.constant 0 : index
    %15 = vector.load %arg2[%c0_5, %c0_6] : memref<1x32xf32, #tpu.memory_space<vmem>>, vector<1x32xf32>
    %c0_7 = arith.constant 0 : index
    %c0_8 = arith.constant 0 : index
    %16 = vector.load %arg3[%c0_7, %c0_8] : memref<1x32xf32, #tpu.memory_space<vmem>>, vector<1x32xf32>
    %17 = vector.broadcast %14 : vector<16x1xf32> to vector<16x32xf32>
    %18 = vector.broadcast %15 : vector<1x32xf32> to vector<16x32xf32>
    %19 = arith.mulf %17, %18 : vector<16x32xf32>
    %20 = arith.mulf %6, %19 : vector<16x32xf32>
    %21 = vector.broadcast %16 : vector<1x32xf32> to vector<16x32xf32>
    %22 = arith.addf %20, %21 : vector<16x32xf32>
    %c0_9 = arith.constant 0 : index
    %c0_10 = arith.constant 0 : index
    %23 = vector.load %arg4[%c0_9, %c0_10] : memref<16x32xf32, #tpu.memory_space<vmem>>, vector<16x32xf32>
    tpu.vector_store %arg4[%c0_9, %c0_10], %22 {strides = array<i32>} : memref<16x32xf32, #tpu.memory_space<vmem>>, vector<16x32xf32>,
    return
  }
  func.func @transform_0(%arg0: i32) -> (i32, i32) {
    %c0_i32 = arith.constant 0 : i32
    %c0_i32_0 = arith.constant 0 : i32
    return %arg0, %c0_i32 : i32, i32
  }
  func.func @transform_1(%arg0: i32) -> (i32, i32) {
    %c0_i32 = arith.constant 0 : i32
    %c0_i32_0 = arith.constant 0 : i32
    %c0_i32_1 = arith.constant 0 : i32
    return %c0_i32, %c0_i32_0 : i32, i32
  }
  func.func @transform_2(%arg0: i32) -> (i32, i32) {
    %c0_i32 = arith.constant 0 : i32
    %c0_i32_0 = arith.constant 0 : i32
    %c0_i32_1 = arith.constant 0 : i32
    return %c0_i32, %c0_i32_0 : i32, i32
  }
  func.func @transform_3(%arg0: i32) -> (i32, i32) {
    %c0_i32 = arith.constant 0 : i32
    %c0_i32_0 = arith.constant 0 : i32
    return %arg0, %c0_i32 : i32, i32
  }
}

</mosaic_0001>

<llo_original>
// kernel: tpu_custom_call.1
$region0: #{tpu_custom_call.1}
  #allocation0 [shape = 'u32[]', space=smem, size = 0x4, offset = 0x4, fixed_abs, tag = 'smem constant byte address 0x4 - core index']
  #allocation1 [shape = 'u32[144,128]{1,0:T(1,128)}', space=vmem, size = 0x12000, scoped, tag = 'internal scratch']
  %s0 = inlined_call_operand.hbm [shape: f32[16,32], index: 0, kind: input, shape index: {}]
  %s1 = inlined_call_operand.vmem [shape: f32[1,32], index: 1, kind: input, shape index: {}]
  %s2 = inlined_call_operand.vmem [shape: f32[1,32], index: 2, kind: input, shape index: {}]
  %s3 = inlined_call_operand.hbm [shape: f32[16,32], index: 3, kind: output, shape index: {}]
  %s4 = sld [smem:[#allocation0]]
  $region26: #{tpu_custom_call.1} parent=0
    _
  %s6 = ssub.s32 1, %s4
  %s7 = scalar_select 0, %s6, %s4
  $region1: #{tpu_custom_call.1} parent=0
    #allocation2 [shape = 'u8[8192]{0}', space=vmem, size = 0x2000, scoped, tag = 'input window, operand 0, single buffered']
    #allocation3 [shape = 's32[1]{0}', space=sflag, size = 0x4, scoped, tag = 'scoped memory for tpu_custom_call.1']
    #allocation4 [shape = 's32[1]{0}', space=sflag, size = 0x4, scoped, tag = 'scoped memory for tpu_custom_call.1']
    #allocation5 [shape = 'u8[8192]{0}', space=vmem, size = 0x2000, scoped, tag = 'output window, operand 0, single buffered']
    %8 = vsyncpa [#allocation3], 0
    %9 = vsyncpa [#allocation4], 0
    // Predicated region
    $region2: #{tpu_custom_call.1} parent=1 // pred_check
      _
    $region3: #{tpu_custom_call.1} parent=1 // pred_check_branch
      %11 = sbr.rel (0) target = $region5
    $region4: #{tpu_custom_call.1} parent=1 // pred_region
      %s13 = ssub.s32 256, 256
      %14 = vsyncadd [#allocation3], %s13
      %s15 = sshll.u32 [#allocation2], 4
      %s16 = int_to_ptr.vmem [resolvable:$true] %s15
      %21 = dma.hbm_to_vmem [thread:$0]  %s0, 256, %s16, [#allocation3], 128, 128, 8
    $region5: #{tpu_custom_call.1} parent=1 // pred_fallthru
      _
    // Predicated region
    $region6: #{tpu_custom_call.1} parent=1 // pred_check
      _
    $region7: #{tpu_custom_call.1} parent=1 // pred_check_branch
      %23 = sbr.rel (0) target = $region9
    $region8: #{tpu_custom_call.1} parent=1 // pred_region
      _
    $region9: #{tpu_custom_call.1} parent=1 // pred_fallthru
      _
    // Predicated region
    $region10: #{tpu_custom_call.1} parent=1 // pred_check
      _
    $region11: #{tpu_custom_call.1} parent=1 // pred_check_branch
      %25 = sbr.rel (0) target = $region13
    $region12: #{tpu_custom_call.1} parent=1 // pred_region
      _
    $region13: #{tpu_custom_call.1} parent=1 // pred_fallthru
      _
    // Predicated region
    $region14: #{tpu_custom_call.1} parent=1 // pred_check
      _
    $region15: #{tpu_custom_call.1} parent=1 // pred_check_branch
      %27 = sbr.rel (0) target = $region17
    $region16: #{tpu_custom_call.1} parent=1 // pred_region
      %28 = dma.done [#allocation3], 256
    $region17: #{tpu_custom_call.1} parent=1 // pred_fallthru
      _
    %v29 = vld [vmem:[#allocation2] sm:$0xff]
    %v30 = vld [vmem:[#allocation2 + $0x8] sm:$0xff]
    %vm31 = vcmask 261120
    %v32 = vsel %vm31, %v29, 0.0
    %33 = vadd.xlane.f32.xlu0 %v32
    %v34 = vpop.xlane.xlu0 %33
    %v35 = vsel %vm31, %v30, 0.0
    %36 = vadd.xlane.f32.xlu0 %v35
    %v37 = vpop.xlane.xlu0 %36
    %v38 = vmul.f32 %v34, 0.03125
    %v39 = vmul.f32 %v37, 0.03125
    %v40 = vsub.f32 %v29, %v38
    %v41 = vsub.f32 %v30, %v39
    %v42 = vmul.f32 %v40, %v40
    %v43 = vmul.f32 %v41, %v41
    %v44 = vsel %vm31, %v42, 0.0
    %45 = vadd.xlane.f32.xlu0 %v44
    %v46 = vpop.xlane.xlu0 %45
    %v47 = vsel %vm31, %v43, 0.0
    %48 = vadd.xlane.f32.xlu0 %v47
    %v49 = vpop.xlane.xlu0 %48
    %v50 = vmul.f32 %v46, 0.03125
    %v51 = vmul.f32 %v49, 0.03125
    %v52 = vadd.f32 %v50, 1e-05
    %v53 = vadd.f32 %v51, 1e-05
    %v54 = vrsqrt.pop %v52
    %v55 = vrsqrt.pop %v53
    %v56 = vld [vmem:[%s1] sm:$0x1]
    %v57 = vld [vmem:[%s2] sm:$0x1]
    %v59 = vlaneseq
    %v60 = vshrl.u32 %v59, 7
    %v61 = vsub.s32 0, %v60
    %v62 = vrot.slane %v56, %v61
    %v64 = vmul.f32 %v54, %v62
    %v65 = vmul.f32 %v55, %v62
    %v66 = vmul.f32 %v40, %v64
    %v67 = vmul.f32 %v41, %v65
    %v69 = vlaneseq
    %v70 = vshrl.u32 %v69, 7
    %v71 = vsub.s32 0, %v70
    %v72 = vrot.slane %v57, %v71
    %v74 = vadd.f32 %v66, %v72
    %v75 = vadd.f32 %v67, %v72
    %76 = vst.msk [vmem:[#allocation5] sm:$0xff] %vm31, %v74
    %77 = vst.msk [vmem:[#allocation5 + $0x8] sm:$0xff] %vm31, %v75
    // Predicated region
    $region18: #{tpu_custom_call.1} parent=1 // pred_check
      _
    $region19: #{tpu_custom_call.1} parent=1 // pred_check_branch
      %79 = sbr.rel (0) target = $region21
    $region20: #{tpu_custom_call.1} parent=1 // pred_region
      %s81 = ssub.s32 256, 256
      %82 = vsyncadd [#allocation4], %s81
      %s83 = sshll.u32 [#allocation5], 4
      %s84 = int_to_ptr.vmem [resolvable:$true] %s83
      %89 = dma.vmem_to_hbm [thread:$0]  %s84, 256, %s3, [#allocation4], 128, 128, 8
    $region21: #{tpu_custom_call.1} parent=1 // pred_fallthru
      _
    // Predicated region
    $region22: #{tpu_custom_call.1} parent=1 // pred_check
      _
    $region23: #{tpu_custom_call.1} parent=1 // pred_check_branch
      %91 = sbr.rel (0) target = $region25
    $region24: #{tpu_custom_call.1} parent=1 // pred_region
      %92 = dma.done [#allocation4], 256
    $region25: #{tpu_custom_call.1} parent=1 // pred_fallthru
      _
    %93 = vsyncpa [#allocation3], 1
    %94 = vsyncpa [#allocation4], 1

</llo_original>
